<compile_context>
chip_gen: v6e
topology: v6e:2x2x1
jax: 0.10.0
libtpu: 0.0.40
codegen_flags: <defaults>
</compile_context>

<pallas_src>
import functools
import math

import jax
import jax.numpy as jnp
from jax.experimental import pallas as pl
from jax.experimental.pallas import tpu as pltpu


# ----------------------------------------------------------------------------
# Fused Pallas kernel: BatchMLP + cross-attention for one batch tile (Bt batches).
# ----------------------------------------------------------------------------
def _fused_encoder_kernel(*refs, num_layers: int, scale: float, d_x: int):
    """refs = (xy, tx, w1, b1, ..., wL, bL, out).

    xy:  (Bt, N, d_x+d_y)  pre-concatenated [context_x | context_y]
    tx:  (Bt, M, d_x)
    wi / bi: full weight matrices / (1, F) biases (resident in VMEM)
    out: (Bt, M, d_out)
    """
    xy_ref, tx_ref = refs[0], refs[1]
    o_ref = refs[-1]
    w_refs = refs[2:-1]

    xy = xy_ref[...]                       # (Bt, N, d_xy)
    tx = tx_ref[...]                       # (Bt, M, d_x)
    Bt, N, d_xy = xy.shape

    # ---- BatchMLP on flattened rows: one tall matmul per layer ---------------
    # Collapsing leading dims (Bt, N, d) -> (Bt*N, d) is layout-free (N = 8).
    h = xy.reshape(Bt * N, d_xy)
    for layer in range(num_layers):
        w = w_refs[2 * layer][...]
        b = w_refs[2 * layer + 1][...]     # (1, F) — broadcasts over rows
        h = jnp.dot(h, w, preferred_element_type=jnp.float32) + b
        if layer != num_layers - 1:
            h = jnp.maximum(h, 0.0)
    v = h.reshape(Bt, N, -1)               # (Bt, N, d_out) — attention values

    # ---- Scaled dot-product cross-attention (q=target_x, k=context_x) -------
    # Keys are a static lane slice of the concatenated input (free).
    cx = xy[..., :d_x]                     # (Bt, N, d_x)
    scores = jnp.einsum("bmd,bnd->bmn", tx, cx,
                        preferred_element_type=jnp.float32) * scale
    scores = scores - jnp.max(scores, axis=-1, keepdims=True)
    p = jnp.exp(scores)
    p = p / jnp.sum(p, axis=-1, keepdims=True)   # exact divide (one per tile)

    out = jnp.einsum("bmn,bnd->bmd", p, v,
                     preferred_element_type=jnp.float32)        # (Bt, M, d_out)
    o_ref[...] = out.astype(o_ref.dtype)


def deterministic_encoder_forward(params, context_x, context_y, target_x):
    """params: list of (w, b) per MLP layer. Returns [B, M, output_sizes[-1]]."""
    B, N, d_x = context_x.shape
    _, _, d_y = context_y.shape
    _, M, _ = target_x.shape
    num_layers = len(params)
    d_out = params[-1][0].shape[1]
    d_xy = d_x + d_y

    # One trivial XLA concat in HBM (~KBs); lets layer 1 run as a single
    # K = d_x+d_y matmul and the attention keys come from an in-kernel slice.
    context_xy = jnp.concatenate([context_x, context_y], axis=-1)

    weight_args = []
    for w, b in params:
        weight_args += [w, b.reshape(1, -1)]

    # Batch tiling: as few, fat grid steps as possible, but keep 2 "parallel"
    # steps when B allows so both v7x TensorCores get work (v5e/v6e: 1 TC).
    n_steps = 2 if (B % 2 == 0 and B >= 2) else 1
    Bt = B // n_steps

    act_specs = [
        pl.BlockSpec((Bt, N, d_xy), lambda b: (b, 0, 0)),
        pl.BlockSpec((Bt, M, d_x), lambda b: (b, 0, 0)),
    ]
    # Small weights stay fully resident in VMEM (constant index_map).
    weight_specs = [pl.BlockSpec(a.shape, lambda b: (0, 0)) for a in weight_args]

    kernel = functools.partial(
        _fused_encoder_kernel,
        num_layers=num_layers,
        scale=1.0 / math.sqrt(d_x),
        d_x=d_x,
    )

    return pl.pallas_call(
        kernel,
        out_shape=jax.ShapeDtypeStruct((B, M, d_out), context_x.dtype),
        grid=(n_steps,),
        in_specs=act_specs + weight_specs,
        out_specs=pl.BlockSpec((Bt, M, d_out), lambda b: (b, 0, 0)),
        compiler_params=pltpu.CompilerParams(
            dimension_semantics=("parallel",)),
    )(context_xy, target_x, *weight_args)


# ----------------------------------------------------------------------------
# Parameter init (mirrors nn.Linear default: U(-1/sqrt(fan_in), 1/sqrt(fan_in)))
# ----------------------------------------------------------------------------
def init_batch_mlp_params(key, xy_size, output_sizes):
    params = []
    in_dim = xy_size
    for out_dim in output_sizes:
        key, kw, kb = jax.random.split(key, 3)
        bound = 1.0 / math.sqrt(in_dim)
        w = jax.random.uniform(kw, (in_dim, out_dim), jnp.float32, -bound, bound)
        b = jax.random.uniform(kb, (out_dim,), jnp.float32, -bound, bound)
        params.append((w, b))
        in_dim = out_dim
    return params


# ----------------------------------------------------------------------------
# Pure-JAX reference (correctness spot check)
# ----------------------------------------------------------------------------
def _reference_forward(params, context_x, context_y, target_x):
    x = jnp.concatenate([context_x, context_y], axis=-1)
    B, N, xy = x.shape
    h = x.reshape(B * N, xy)
    for i, (w, b) in enumerate(params):
        h = h @ w + b
        if i != len(params) - 1:
            h = jnp.maximum(h, 0.0)
    v = h.reshape(B, N, -1)
    scale = 1.0 / jnp.sqrt(jnp.float32(target_x.shape[-1]))
    scores = jnp.einsum("bmd,bnd->bmn", target_x, context_x) * scale
    probs = jax.nn.softmax(scores, axis=-1)
    return jnp.einsum("bmn,bnd->bmd", probs, v)


# ----------------------------------------------------------------------------
# Main
# ----------------------------------------------------------------------------
if __name__ == "__main__":
    key = jax.random.PRNGKey(0)

    B = 4            # batch (2 "parallel" grid steps x 2 batches per step)
    N = 8            # context observations
    M = 8            # target observations
    d_x = 8          # x dimensionality
    d_y = 8          # y dimensionality
    output_sizes = (32, 32, 32)
    xy_size = d_x + d_y

    k_cx, k_cy, k_tx, k_params = jax.random.split(key, 4)
    context_x = jax.random.normal(k_cx, (B, N, d_x), jnp.float32)
    context_y = jax.random.normal(k_cy, (B, N, d_y), jnp.float32)
    target_x = jax.random.normal(k_tx, (B, M, d_x), jnp.float32)

    params = init_batch_mlp_params(k_params, xy_size, output_sizes)

    out = deterministic_encoder_forward(params, context_x, context_y, target_x)
    out = jax.block_until_ready(out)

    ref = _reference_forward(params, context_x, context_y, target_x)
    assert out.shape == (B, M, output_sizes[-1])
    # Exact softmax divide (no approx reciprocal) -> tolerance tightened to 1e-4.
    assert jnp.allclose(out, ref, atol=1e-4, rtol=1e-4), "mismatch vs reference"

    print("KERNEL_OK")
</pallas_src>

<mosaic_0001>
module attributes {stable_mosaic.version = 11 : i64} {
  func.func @_fused_encoder_kernel(%arg0: i32, %arg1: memref<2x8x16xf32, #tpu.memory_space<vmem>>, %arg2: memref<2x8x8xf32, #tpu.memory_space<vmem>>, %arg3: memref<16x32xf32, #tpu.memory_space<vmem>>, %arg4: memref<1x32xf32, #tpu.memory_space<vmem>>, %arg5: memref<32x32xf32, #tpu.memory_space<vmem>>, %arg6: memref<1x32xf32, #tpu.memory_space<vmem>>, %arg7: memref<32x32xf32, #tpu.memory_space<vmem>>, %arg8: memref<1x32xf32, #tpu.memory_space<vmem>>, %arg9: memref<2x8x32xf32, #tpu.memory_space<vmem>>) attributes {dimension_semantics = [#tpu.dimension_semantics<parallel>], iteration_bounds = array<i64: 2>, scalar_prefetch = 0 : i64, scratch_operands = 0 : i64, tpu.core_type = #tpu.core_type<tc>, window_params = [{transform_indices = @transform_0, window_bounds = array<i64: 2, 8, 16>}, {transform_indices = @transform_1, window_bounds = array<i64: 2, 8, 8>}, {pipeline_mode = #tpu.pipeline_mode<synchronous>, transform_indices = @transform_2, window_bounds = array<i64: 16, 32>}, {pipeline_mode = #tpu.pipeline_mode<synchronous>, transform_indices = @transform_3, window_bounds = array<i64: 1, 32>}, {pipeline_mode = #tpu.pipeline_mode<synchronous>, transform_indices = @transform_4, window_bounds = array<i64: 32, 32>}, {pipeline_mode = #tpu.pipeline_mode<synchronous>, transform_indices = @transform_5, window_bounds = array<i64: 1, 32>}, {pipeline_mode = #tpu.pipeline_mode<synchronous>, transform_indices = @transform_6, window_bounds = array<i64: 32, 32>}, {pipeline_mode = #tpu.pipeline_mode<synchronous>, transform_indices = @transform_7, window_bounds = array<i64: 1, 32>}, {transform_indices = @transform_8, window_bounds = array<i64: 2, 8, 32>}]} {
    %c0 = arith.constant 0 : index
    %c0_0 = arith.constant 0 : index
    %c0_1 = arith.constant 0 : index
    %0 = vector.load %arg1[%c0, %c0_0, %c0_1] : memref<2x8x16xf32, #tpu.memory_space<vmem>>, vector<2x8x16xf32>
    %c0_2 = arith.constant 0 : index
    %c0_3 = arith.constant 0 : index
    %c0_4 = arith.constant 0 : index
    %1 = vector.load %arg2[%c0_2, %c0_3, %c0_4] : memref<2x8x8xf32, #tpu.memory_space<vmem>>, vector<2x8x8xf32>
    %2 = vector.shape_cast %0 : vector<2x8x16xf32> to vector<16x16xf32>
    %c0_5 = arith.constant 0 : index
    %c0_6 = arith.constant 0 : index
    %3 = vector.load %arg3[%c0_5, %c0_6] : memref<16x32xf32, #tpu.memory_space<vmem>>, vector<16x32xf32>
    %c0_7 = arith.constant 0 : index
    %c0_8 = arith.constant 0 : index
    %4 = vector.load %arg4[%c0_7, %c0_8] : memref<1x32xf32, #tpu.memory_space<vmem>>, vector<1x32xf32>
    %cst = arith.constant dense<0.000000e+00> : vector<16x32xf32>
    %5 = tpu.matmul %2, %3, %cst {dimension_numbers = #tpu.dot_dimension_numbers<[1], [0], [0], [1], [0, 0, 1, 1], [], []>} : vector<16x16xf32>, vector<16x32xf32>, vector<16x32xf32> -> vector<16x32xf32>
    %6 = vector.broadcast %4 : vector<1x32xf32> to vector<16x32xf32>
    %7 = arith.addf %5, %6 : vector<16x32xf32>
    %cst_9 = arith.constant 0.000000e+00 : f32
    %8 = vector.broadcast %cst_9 : f32 to vector<16x32xf32>
    %9 = arith.maximumf %7, %8 : vector<16x32xf32>
    %c0_10 = arith.constant 0 : index
    %c0_11 = arith.constant 0 : index
    %10 = vector.load %arg5[%c0_10, %c0_11] : memref<32x32xf32, #tpu.memory_space<vmem>>, vector<32x32xf32>
    %c0_12 = arith.constant 0 : index
    %c0_13 = arith.constant 0 : index
    %11 = vector.load %arg6[%c0_12, %c0_13] : memref<1x32xf32, #tpu.memory_space<vmem>>, vector<1x32xf32>
    %cst_14 = arith.constant dense<0.000000e+00> : vector<16x32xf32>
    %12 = tpu.matmul %9, %10, %cst_14 {dimension_numbers = #tpu.dot_dimension_numbers<[1], [0], [0], [1], [0, 0, 1, 1], [], []>} : vector<16x32xf32>, vector<32x32xf32>, vector<16x32xf32> -> vector<16x32xf32>
    %13 = vector.broadcast %11 : vector<1x32xf32> to vector<16x32xf32>
    %14 = arith.addf %12, %13 : vector<16x32xf32>
    %cst_15 = arith.constant 0.000000e+00 : f32
    %15 = vector.broadcast %cst_15 : f32 to vector<16x32xf32>
    %16 = arith.maximumf %14, %15 : vector<16x32xf32>
    %c0_16 = arith.constant 0 : index
    %c0_17 = arith.constant 0 : index
    %17 = vector.load %arg7[%c0_16, %c0_17] : memref<32x32xf32, #tpu.memory_space<vmem>>, vector<32x32xf32>
    %c0_18 = arith.constant 0 : index
    %c0_19 = arith.constant 0 : index
    %18 = vector.load %arg8[%c0_18, %c0_19] : memref<1x32xf32, #tpu.memory_space<vmem>>, vector<1x32xf32>
    %cst_20 = arith.constant dense<0.000000e+00> : vector<16x32xf32>
    %19 = tpu.matmul %16, %17, %cst_20 {dimension_numbers = #tpu.dot_dimension_numbers<[1], [0], [0], [1], [0, 0, 1, 1], [], []>} : vector<16x32xf32>, vector<32x32xf32>, vector<16x32xf32> -> vector<16x32xf32>
    %20 = vector.broadcast %18 : vector<1x32xf32> to vector<16x32xf32>
    %21 = arith.addf %19, %20 : vector<16x32xf32>
    %22 = vector.shape_cast %21 : vector<16x32xf32> to vector<2x8x32xf32>
    %23 = vector.extract_strided_slice %0 {offsets = [0, 0, 0], sizes = [2, 8, 8], strides = [1, 1, 1]} : vector<2x8x16xf32> to vector<2x8x8xf32>
    "tpu.trace_start"() <{level = 10 : i32, message = "bmd,bnd->bmn"}> : () -> ()
    %cst_21 = arith.constant dense<0.000000e+00> : vector<2x8x8xf32>
    %24 = tpu.matmul %1, %23, %cst_21 {dimension_numbers = #tpu.dot_dimension_numbers<[2], [2], [1], [1], [0, 0, 0, 1, 1, 1], [0], [0]>} : vector<2x8x8xf32>, vector<2x8x8xf32>, vector<2x8x8xf32> -> vector<2x8x8xf32>
    "tpu.trace_stop"() : () -> ()
    %cst_22 = arith.constant 0.353553385 : f32
    %25 = vector.broadcast %cst_22 : f32 to vector<2x8x8xf32>
    %26 = arith.mulf %24, %25 : vector<2x8x8xf32>
    %cst_23 = arith.constant dense<0xFF800000> : vector<2x8xf32>
    %27 = vector.multi_reduction <maximumf>, %26, %cst_23 [2] : vector<2x8x8xf32> to vector<2x8xf32>
    %28 = vector.shape_cast %27 : vector<2x8xf32> to vector<2x8x1xf32>
    %29 = vector.broadcast %28 : vector<2x8x1xf32> to vector<2x8x8xf32>
    %30 = arith.subf %26, %29 : vector<2x8x8xf32>
    %31 = math.exp %30 : vector<2x8x8xf32>
    %cst_24 = arith.constant dense<0.000000e+00> : vector<2x8xf32>
    %32 = vector.multi_reduction <add>, %31, %cst_24 [2] : vector<2x8x8xf32> to vector<2x8xf32>
    %33 = vector.shape_cast %32 : vector<2x8xf32> to vector<2x8x1xf32>
    %34 = vector.broadcast %33 : vector<2x8x1xf32> to vector<2x8x8xf32>
    %35 = arith.divf %31, %34 : vector<2x8x8xf32>
    "tpu.trace_start"() <{level = 10 : i32, message = "bmn,bnd->bmd"}> : () -> ()
    %cst_25 = arith.constant dense<0.000000e+00> : vector<2x8x32xf32>
    %36 = tpu.matmul %35, %22, %cst_25 {dimension_numbers = #tpu.dot_dimension_numbers<[2], [1], [1], [2], [0, 0, 0, 1, 1, 2], [0], [0]>} : vector<2x8x8xf32>, vector<2x8x32xf32>, vector<2x8x32xf32> -> vector<2x8x32xf32>
    "tpu.trace_stop"() : () -> ()
    %c0_26 = arith.constant 0 : index
    %c0_27 = arith.constant 0 : index
    %c0_28 = arith.constant 0 : index
    %37 = vector.load %arg9[%c0_26, %c0_27, %c0_28] : memref<2x8x32xf32, #tpu.memory_space<vmem>>, vector<2x8x32xf32>
    tpu.vector_store %arg9[%c0_26, %c0_27, %c0_28], %36 {strides = array<i32>} : memref<2x8x32xf32, #tpu.memory_space<vmem>>, vector<2x8x32xf32>,
    return
  }
  func.func @transform_0(%arg0: i32) -> (i32, i32, i32) {
    %c0_i32 = arith.constant 0 : i32
    %c0_i32_0 = arith.constant 0 : i32
    %c0_i32_1 = arith.constant 0 : i32
    return %arg0, %c0_i32, %c0_i32_0 : i32, i32, i32
  }
  func.func @transform_1(%arg0: i32) -> (i32, i32, i32) {
    %c0_i32 = arith.constant 0 : i32
    %c0_i32_0 = arith.constant 0 : i32
    %c0_i32_1 = arith.constant 0 : i32
    return %arg0, %c0_i32, %c0_i32_0 : i32, i32, i32
  }
  func.func @transform_2(%arg0: i32) -> (i32, i32) {
    %c0_i32 = arith.constant 0 : i32
    %c0_i32_0 = arith.constant 0 : i32
    %c0_i32_1 = arith.constant 0 : i32
    return %c0_i32, %c0_i32_0 : i32, i32
  }
  func.func @transform_3(%arg0: i32) -> (i32, i32) {
    %c0_i32 = arith.constant 0 : i32
    %c0_i32_0 = arith.constant 0 : i32
    %c0_i32_1 = arith.constant 0 : i32
    return %c0_i32, %c0_i32_0 : i32, i32
  }
  func.func @transform_4(%arg0: i32) -> (i32, i32) {
    %c0_i32 = arith.constant 0 : i32
    %c0_i32_0 = arith.constant 0 : i32
    %c0_i32_1 = arith.constant 0 : i32
    return %c0_i32, %c0_i32_0 : i32, i32
  }
  func.func @transform_5(%arg0: i32) -> (i32, i32) {
    %c0_i32 = arith.constant 0 : i32
    %c0_i32_0 = arith.constant 0 : i32
    %c0_i32_1 = arith.constant 0 : i32
    return %c0_i32, %c0_i32_0 : i32, i32
  }
  func.func @transform_6(%arg0: i32) -> (i32, i32) {
    %c0_i32 = arith.constant 0 : i32
    %c0_i32_0 = arith.constant 0 : i32
    %c0_i32_1 = arith.constant 0 : i32
    return %c0_i32, %c0_i32_0 : i32, i32
  }
  func.func @transform_7(%arg0: i32) -> (i32, i32) {
    %c0_i32 = arith.constant 0 : i32
    %c0_i32_0 = arith.constant 0 : i32
    %c0_i32_1 = arith.constant 0 : i32
    return %c0_i32, %c0_i32_0 : i32, i32
  }
  func.func @transform_8(%arg0: i32) -> (i32, i32, i32) {
    %c0_i32 = arith.constant 0 : i32
    %c0_i32_0 = arith.constant 0 : i32
    %c0_i32_1 = arith.constant 0 : i32
    return %arg0, %c0_i32, %c0_i32_0 : i32, i32, i32
  }
}

</mosaic_0001>

<llo_original>
// kernel: tpu_custom_call.1
$region0: #{tpu_custom_call.1}
  #allocation0 [shape = 'u32[]', space=smem, size = 0x4, offset = 0x4, fixed_abs, tag = 'smem constant byte address 0x4 - core index']
  #allocation1 [shape = 'u32[144,128]{1,0:T(1,128)}', space=vmem, size = 0x12000, scoped, tag = 'internal scratch']
  %s0 = inlined_call_operand.hbm [shape: f32[4,8,16], index: 0, kind: input, shape index: {}]
  %s1 = inlined_call_operand.hbm [shape: f32[4,8,8], index: 1, kind: input, shape index: {}]
  %s2 = inlined_call_operand.hbm [shape: f32[16,32], index: 2, kind: input, shape index: {}]
  %s3 = inlined_call_operand.vmem [shape: f32[1,32], index: 3, kind: input, shape index: {}]
  %s4 = inlined_call_operand.hbm [shape: f32[32,32], index: 4, kind: input, shape index: {}]
  %s5 = inlined_call_operand.vmem [shape: f32[1,32], index: 5, kind: input, shape index: {}]
  %s6 = inlined_call_operand.hbm [shape: f32[32,32], index: 6, kind: input, shape index: {}]
  %s7 = inlined_call_operand.vmem [shape: f32[1,32], index: 7, kind: input, shape index: {}]
  %s8 = inlined_call_operand.hbm [shape: f32[4,8,32], index: 8, kind: output, shape index: {}]
  %s9 = sld [smem:[#allocation0]]
  $region85: #{tpu_custom_call.1} parent=0
    _
  %s11 = ssub.s32 1, %s9
  %s12 = scalar_select 0, %s11, %s9
  $region1: #{tpu_custom_call.1} parent=0
    #allocation2 [shape = 'u8[16384]{0}', space=vmem, size = 0x4000, scoped, tag = 'input window, operand 0']
    #allocation3 [shape = 's32[2]{0}', space=sflag, size = 0x8, scoped, tag = 'scoped memory for tpu_custom_call.1']
    #allocation4 [shape = 's32[2]{0}', space=sflag, size = 0x8, scoped, tag = 'scoped memory for tpu_custom_call.1']
    #allocation5 [shape = 'u8[16384]{0}', space=vmem, size = 0x4000, scoped, tag = 'input window, operand 1']
    #allocation6 [shape = 's32[2]{0}', space=sflag, size = 0x8, scoped, tag = 'scoped memory for tpu_custom_call.1']
    #allocation7 [shape = 'u8[8192]{0}', space=vmem, size = 0x2000, scoped, tag = 'input window, operand 2, single buffered']
    #allocation8 [shape = 'u8[16384]{0}', space=vmem, size = 0x4000, scoped, tag = 'input window, operand 4, single buffered']
    #allocation9 [shape = 's32[1]{0}', space=sflag, size = 0x4, scoped, tag = 'scoped memory for tpu_custom_call.1']
    #allocation10 [shape = 'u8[16384]{0}', space=vmem, size = 0x4000, scoped, tag = 'input window, operand 6, single buffered']
    #allocation11 [shape = 'u8[16384]{0}', space=vmem, size = 0x4000, scoped, tag = 'output window, operand 0']
    %13 = vsyncpa [#allocation3], 0
    %s14 = scalar_lea.sflag [#allocation3], 1
    %15 = vsyncpa %s14, 0
    %16 = vsyncpa [#allocation6], 0
    %s17 = scalar_lea.sflag [#allocation6], 1
    %18 = vsyncpa %s17, 0
    %19 = vsyncpa [#allocation9], 0
    %20 = vsyncpa [#allocation4], 0
    %s21 = scalar_lea.sflag [#allocation4], 1
    %22 = vsyncpa %s21, 0
    loop: start=0, step=1, limit=4
    $region2: #{tpu_custom_call.1} parent=1 // loop_pre_header
      _
    $region3: #{tpu_custom_call.1} parent=1 // loop_header
      %s24 = sphi 0, %s28
      %p25 = scmp.ge.s32.totalorder %s24, 4
      %s34 = sphi 0, %s36
      %s37 = sphi 0, %s34
      %s38 = sphi 0, %s37
      %s54 = sphi 0, %s38
      %s60 = sphi 0, %s62
      %s63 = sphi 0, %s60
      %s64 = sphi 0, %s63
      %s80 = sphi 0, %s64
      %s84 = sphi 0, %s84
      %s86 = sphi 0, %s84
      %s87 = sphi 0, %s86
      %s101 = sphi 0, %s87
      %s105 = sphi 0, %s105
      %s107 = sphi 0, %s105
      %s108 = sphi 0, %s107
      %s122 = sphi 0, %s108
      %s126 = sphi 0, %s126
      %s128 = sphi 0, %s126
      %s129 = sphi 0, %s128
      %s143 = sphi 0, %s129
      %s147 = sphi 0, %s147
      %s149 = sphi 0, %s147
      %s150 = sphi 0, %s149
      %s164 = sphi 0, %s150
      %s168 = sphi 0, %s168
      %s170 = sphi 0, %s168
      %s171 = sphi 0, %s170
      %s185 = sphi 0, %s171
      %s189 = sphi 0, %s189
      %s191 = sphi 0, %s189
      %s192 = sphi 0, %s191
      %s206 = sphi 0, %s192
      %s212 = sphi 0, %s214
      %s215 = sphi 0, %s212
      %s216 = sphi 0, %s215
      %s232 = sphi 0, %s216
    $region4: #{tpu_custom_call.1} parent=1 // loop_header_branch
      %27 = sbr.rel (%p25) target = $region8
    $region5: #{tpu_custom_call.1} parent=1 // loop_body
      %s29 = ssub.s32 %s24, 1
      %s30 = ssub.s32 %s24, 2
      %s31 = sadd.s32 %s24, 1
      %s32 = ssub.s32 %s24, %s31
      %p33 = scmp.eq.s32.totalorder %s32, 0
      %s35 = sadd.s32 %s34, 1
      %s36 = scalar_select %p33, %s34, %s35
      %p39 = pneg %p33
      %p40 = scmp.eq.s32.totalorder %s24, 1
      %p41 = por %p39, %p40
      %p42 = scmp.ne.s32.totalorder %s34, %s37
      %p43 = scmp.eq.s32.totalorder %s24, 0
      %p44 = por %p42, %p43
      %p45 = scmp.ne.s32.totalorder %s34, %s37
      %p46 = scmp.eq.s32.totalorder %s29, 1
      %p47 = por %p45, %p46
      %p48 = scmp.ne.s32.totalorder %s37, %s38
      %p49 = scmp.eq.s32.totalorder %s29, 0
      %p50 = por %p48, %p49
      %p51 = scmp.ne.s32.totalorder %s37, %s38
      %p52 = scmp.eq.s32.totalorder %s30, 1
      %p53 = por %p51, %p52
      %p55 = scmp.ne.s32.totalorder %s38, %s54
      %p56 = scmp.eq.s32.totalorder %s30, 0
      %p57 = por %p55, %p56
      %s58 = ssub.s32 %s24, %s31
      %p59 = scmp.eq.s32.totalorder %s58, 0
      %s61 = sadd.s32 %s60, 1
      %s62 = scalar_select %p59, %s60, %s61
      %p65 = pneg %p59
      %p66 = scmp.eq.s32.totalorder %s24, 1
      %p67 = por %p65, %p66
      %p68 = scmp.ne.s32.totalorder %s60, %s63
      %p69 = scmp.eq.s32.totalorder %s24, 0
      %p70 = por %p68, %p69
      %p71 = scmp.ne.s32.totalorder %s60, %s63
      %p72 = scmp.eq.s32.totalorder %s29, 1
      %p73 = por %p71, %p72
      %p74 = scmp.ne.s32.totalorder %s63, %s64
      %p75 = scmp.eq.s32.totalorder %s29, 0
      %p76 = por %p74, %p75
      %p77 = scmp.ne.s32.totalorder %s63, %s64
      %p78 = scmp.eq.s32.totalorder %s30, 1
      %p79 = por %p77, %p78
      %p81 = scmp.ne.s32.totalorder %s64, %s80
      %p82 = scmp.eq.s32.totalorder %s30, 0
      %p83 = por %p81, %p82
      %s85 = sadd.s32 %s84, 1
      %p88 = scmp.eq.s32.totalorder %s24, 1
      %p89 = scmp.ne.s32.totalorder %s84, %s86
      %p90 = scmp.eq.s32.totalorder %s24, 0
      %p91 = por %p89, %p90
      %p92 = scmp.ne.s32.totalorder %s84, %s86
      %p93 = scmp.eq.s32.totalorder %s29, 1
      %p94 = por %p92, %p93
      %p95 = scmp.ne.s32.totalorder %s86, %s87
      %p96 = scmp.eq.s32.totalorder %s29, 0
      %p97 = por %p95, %p96
      %p98 = scmp.ne.s32.totalorder %s86, %s87
      %p99 = scmp.eq.s32.totalorder %s30, 1
      %p100 = por %p98, %p99
      %p102 = scmp.ne.s32.totalorder %s87, %s101
      %p103 = scmp.eq.s32.totalorder %s30, 0
      %p104 = por %p102, %p103
      %s106 = sadd.s32 %s105, 1
      %p109 = scmp.eq.s32.totalorder %s24, 1
      %p110 = scmp.ne.s32.totalorder %s105, %s107
      %p111 = scmp.eq.s32.totalorder %s24, 0
      %p112 = por %p110, %p111
      %p113 = scmp.ne.s32.totalorder %s105, %s107
      %p114 = scmp.eq.s32.totalorder %s29, 1
      %p115 = por %p113, %p114
      %p116 = scmp.ne.s32.totalorder %s107, %s108
      %p117 = scmp.eq.s32.totalorder %s29, 0
      %p118 = por %p116, %p117
      %p119 = scmp.ne.s32.totalorder %s107, %s108
      %p120 = scmp.eq.s32.totalorder %s30, 1
      %p121 = por %p119, %p120
      %p123 = scmp.ne.s32.totalorder %s108, %s122
      %p124 = scmp.eq.s32.totalorder %s30, 0
      %p125 = por %p123, %p124
      %s127 = sadd.s32 %s126, 1
      %p130 = scmp.eq.s32.totalorder %s24, 1
      %p131 = scmp.ne.s32.totalorder %s126, %s128
      %p132 = scmp.eq.s32.totalorder %s24, 0
      %p133 = por %p131, %p132
      %p134 = scmp.ne.s32.totalorder %s126, %s128
      %p135 = scmp.eq.s32.totalorder %s29, 1
      %p136 = por %p134, %p135
      %p137 = scmp.ne.s32.totalorder %s128, %s129
      %p138 = scmp.eq.s32.totalorder %s29, 0
      %p139 = por %p137, %p138
      %p140 = scmp.ne.s32.totalorder %s128, %s129
      %p141 = scmp.eq.s32.totalorder %s30, 1
      %p142 = por %p140, %p141
      %p144 = scmp.ne.s32.totalorder %s129, %s143
      %p145 = scmp.eq.s32.totalorder %s30, 0
      %p146 = por %p144, %p145
      %s148 = sadd.s32 %s147, 1
      %p151 = scmp.eq.s32.totalorder %s24, 1
      %p152 = scmp.ne.s32.totalorder %s147, %s149
      %p153 = scmp.eq.s32.totalorder %s24, 0
      %p154 = por %p152, %p153
      %p155 = scmp.ne.s32.totalorder %s147, %s149
      %p156 = scmp.eq.s32.totalorder %s29, 1
      %p157 = por %p155, %p156
      %p158 = scmp.ne.s32.totalorder %s149, %s150
      %p159 = scmp.eq.s32.totalorder %s29, 0
      %p160 = por %p158, %p159
      %p161 = scmp.ne.s32.totalorder %s149, %s150
      %p162 = scmp.eq.s32.totalorder %s30, 1
      %p163 = por %p161, %p162
      %p165 = scmp.ne.s32.totalorder %s150, %s164
      %p166 = scmp.eq.s32.totalorder %s30, 0
      %p167 = por %p165, %p166
      %s169 = sadd.s32 %s168, 1
      %p172 = scmp.eq.s32.totalorder %s24, 1
      %p173 = scmp.ne.s32.totalorder %s168, %s170
      %p174 = scmp.eq.s32.totalorder %s24, 0
      %p175 = por %p173, %p174
      %p176 = scmp.ne.s32.totalorder %s168, %s170
      %p177 = scmp.eq.s32.totalorder %s29, 1
      %p178 = por %p176, %p177
      %p179 = scmp.ne.s32.totalorder %s170, %s171
      %p180 = scmp.eq.s32.totalorder %s29, 0
      %p181 = por %p179, %p180
      %p182 = scmp.ne.s32.totalorder %s170, %s171
      %p183 = scmp.eq.s32.totalorder %s30, 1
      %p184 = por %p182, %p183
      %p186 = scmp.ne.s32.totalorder %s171, %s185
      %p187 = scmp.eq.s32.totalorder %s30, 0
      %p188 = por %p186, %p187
      %s190 = sadd.s32 %s189, 1
      %p193 = scmp.eq.s32.totalorder %s24, 1
      %p194 = scmp.ne.s32.totalorder %s189, %s191
      %p195 = scmp.eq.s32.totalorder %s24, 0
      %p196 = por %p194, %p195
      %p197 = scmp.ne.s32.totalorder %s189, %s191
      %p198 = scmp.eq.s32.totalorder %s29, 1
      %p199 = por %p197, %p198
      %p200 = scmp.ne.s32.totalorder %s191, %s192
      %p201 = scmp.eq.s32.totalorder %s29, 0
      %p202 = por %p200, %p201
      %p203 = scmp.ne.s32.totalorder %s191, %s192
      %p204 = scmp.eq.s32.totalorder %s30, 1
      %p205 = por %p203, %p204
      %p207 = scmp.ne.s32.totalorder %s192, %s206
      %p208 = scmp.eq.s32.totalorder %s30, 0
      %p209 = por %p207, %p208
      %s210 = ssub.s32 %s24, %s31
      %p211 = scmp.eq.s32.totalorder %s210, 0
      %s213 = sadd.s32 %s212, 1
      %s214 = scalar_select %p211, %s212, %s213
      %p217 = pneg %p211
      %p218 = scmp.eq.s32.totalorder %s24, 1
      %p219 = por %p217, %p218
      %p220 = scmp.ne.s32.totalorder %s212, %s215
      %p221 = scmp.eq.s32.totalorder %s24, 0
      %p222 = por %p220, %p221
      %p223 = scmp.ne.s32.totalorder %s212, %s215
      %p224 = scmp.eq.s32.totalorder %s29, 1
      %p225 = por %p223, %p224
      %p226 = scmp.ne.s32.totalorder %s215, %s216
      %p227 = scmp.eq.s32.totalorder %s29, 0
      %p228 = por %p226, %p227
      %p229 = scmp.ne.s32.totalorder %s215, %s216
      %p230 = scmp.eq.s32.totalorder %s30, 1
      %p231 = por %p229, %p230
      %p233 = scmp.ne.s32.totalorder %s216, %s232
      %p234 = scmp.eq.s32.totalorder %s30, 0
      %p235 = por %p233, %p234
      %p236 = scmp.le.s32.totalorder 1, %s24
      %p237 = scmp.lt.s32.totalorder %s24, 3
      %p238 = pnand %p236, %p237
      %p239 = pneg %p238
      // Predicated region
      $region9: #{tpu_custom_call.1} parent=5 // pred_check
        _
      $region10: #{tpu_custom_call.1} parent=5 // pred_check_branch
        %241 = sbr.rel (%p238) target = $region12
      $region11: #{tpu_custom_call.1} parent=5 // pred_region
        %s242 = ssub.s32 %s24, 1
        // Predicated region
        $region13: #{tpu_custom_call.1} parent=11 // pred_check
          %p243 = pneg %p97
        $region14: #{tpu_custom_call.1} parent=11 // pred_check_branch
          %245 = sbr.rel (%p243) target = $region16
        $region15: #{tpu_custom_call.1} parent=11 // pred_region
          %s247 = ssub.s32 256, 256
          %248 = vsyncadd [#allocation6], %s247
          %s249 = sshll.u32 [#allocation7], 4
          %s250 = int_to_ptr.vmem [resolvable:$true] %s249
          %255 = dma.hbm_to_vmem [thread:$0]  %s2, 256, %s250, [#allocation6], 128, 128, 8
        $region16: #{tpu_custom_call.1} parent=11 // pred_fallthru
          _
        // Predicated region
        $region17: #{tpu_custom_call.1} parent=11 // pred_check
          %p256 = pneg %p118
        $region18: #{tpu_custom_call.1} parent=11 // pred_check_branch
          %258 = sbr.rel (%p256) target = $region20
        $region19: #{tpu_custom_call.1} parent=11 // pred_region
          _
        $region20: #{tpu_custom_call.1} parent=11 // pred_fallthru
          _
        // Predicated region
        $region21: #{tpu_custom_call.1} parent=11 // pred_check
          %p259 = pneg %p139
        $region22: #{tpu_custom_call.1} parent=11 // pred_check_branch
          %261 = sbr.rel (%p259) target = $region24
        $region23: #{tpu_custom_call.1} parent=11 // pred_region
          %s263 = ssub.s32 512, 512
          %264 = vsyncadd [#allocation9], %s263
          %s265 = sshll.u32 [#allocation8], 4
          %s266 = int_to_ptr.vmem [resolvable:$true] %s265
          %271 = dma.hbm_to_vmem [thread:$0]  %s4, 512, %s266, [#allocation9], 128, 128, 8
        $region24: #{tpu_custom_call.1} parent=11 // pred_fallthru
          _
        // Predicated region
        $region25: #{tpu_custom_call.1} parent=11 // pred_check
          %p272 = pneg %p160
        $region26: #{tpu_custom_call.1} parent=11 // pred_check_branch
          %274 = sbr.rel (%p272) target = $region28
        $region27: #{tpu_custom_call.1} parent=11 // pred_region
          _
        $region28: #{tpu_custom_call.1} parent=11 // pred_fallthru
          _
        // Predicated region
        $region29: #{tpu_custom_call.1} parent=11 // pred_check
          %p275 = pneg %p181
        $region30: #{tpu_custom_call.1} parent=11 // pred_check_branch
          %277 = sbr.rel (%p275) target = $region32
        $region31: #{tpu_custom_call.1} parent=11 // pred_region
          %s279 = ssub.s32 512, 512
          %280 = vsyncadd [#allocation9], %s279
          %s281 = sshll.u32 [#allocation10], 4
          %s282 = int_to_ptr.vmem [resolvable:$true] %s281
          %287 = dma.hbm_to_vmem [thread:$0]  %s6, 512, %s282, [#allocation9], 128, 128, 8
        $region32: #{tpu_custom_call.1} parent=11 // pred_fallthru
          _
        // Predicated region
        $region33: #{tpu_custom_call.1} parent=11 // pred_check
          %p288 = pneg %p202
        $region34: #{tpu_custom_call.1} parent=11 // pred_check_branch
          %290 = sbr.rel (%p288) target = $region36
        $region35: #{tpu_custom_call.1} parent=11 // pred_region
          _
        $region36: #{tpu_custom_call.1} parent=11 // pred_fallthru
          _
      $region12: #{tpu_custom_call.1} parent=5 // pred_fallthru
        _
      %p291 = scmp.lt.s32.totalorder %s24, 2
      // Predicated region
      $region37: #{tpu_custom_call.1} parent=5 // pred_check
        %p292 = pneg %p291
      $region38: #{tpu_custom_call.1} parent=5 // pred_check_branch
        %294 = sbr.rel (%p292) target = $region40
      $region39: #{tpu_custom_call.1} parent=5 // pred_region
        // Predicated region
        $region41: #{tpu_custom_call.1} parent=39 // pred_check
          %p295 = pneg %p44
        $region42: #{tpu_custom_call.1} parent=39 // pred_check_branch
          %297 = sbr.rel (%p295) target = $region44
        $region43: #{tpu_custom_call.1} parent=39 // pred_region
          %s298 = sand.u32 %s34, 1
          %s299 = scalar_lea.sflag [#allocation3], %s298
          %s300 = sand.u32 %s34, 1
          %s301 = smul.addr %s300, 16
          %s302 = scalar_lea.vmem [#allocation2], %s301
          %s303 = smul.u32 2, %s24
          %s305 = ssub.s32 256, 256
          %306 = vsyncadd %s299, %s305
          %s307 = smul.addr %s303, 128
          %s308 = scalar_lea.hbm %s0, %s307
          %s309 = sshll.u32 %s302, 4
          %s310 = int_to_ptr.vmem [resolvable:$true] %s309
          %315 = dma.hbm_to_vmem [thread:$0]  %s308, 256, %s310, %s299, 128, 128, 8
        $region44: #{tpu_custom_call.1} parent=39 // pred_fallthru
          _
        // Predicated region
        $region45: #{tpu_custom_call.1} parent=39 // pred_check
          %p316 = pneg %p70
        $region46: #{tpu_custom_call.1} parent=39 // pred_check_branch
          %318 = sbr.rel (%p316) target = $region48
        $region47: #{tpu_custom_call.1} parent=39 // pred_region
          %s319 = sand.u32 %s24, 1
          %s320 = scalar_lea.sflag [#allocation6], %s319
          %s321 = sand.u32 %s60, 1
          %s322 = smul.addr %s321, 16
          %s323 = scalar_lea.vmem [#allocation5], %s322
          %s324 = smul.u32 2, %s24
          %s326 = ssub.s32 256, 256
          %327 = vsyncadd %s320, %s326
          %s328 = smul.addr %s324, 128
          %s329 = scalar_lea.hbm %s1, %s328
          %s330 = sshll.u32 %s323, 4
          %s331 = int_to_ptr.vmem [resolvable:$true] %s330
          %336 = dma.hbm_to_vmem [thread:$0]  %s329, 256, %s331, %s320, 128, 128, 8
        $region48: #{tpu_custom_call.1} parent=39 // pred_fallthru
          _
      $region40: #{tpu_custom_call.1} parent=5 // pred_fallthru
        _
      %p337 = scmp.le.s32.totalorder 1, %s24
      %p338 = scmp.lt.s32.totalorder %s24, 3
      %p339 = pnand %p337, %p338
      %p340 = pneg %p339
      // Predicated region
      $region49: #{tpu_custom_call.1} parent=5 // pred_check
        _
      $region50: #{tpu_custom_call.1} parent=5 // pred_check_branch
        %342 = sbr.rel (%p339) target = $region52
      $region51: #{tpu_custom_call.1} parent=5 // pred_region
        %s343 = ssub.s32 %s24, 1
        %s344 = sand.u32 %s37, 1
        %s345 = scalar_lea.sflag [#allocation3], %s344
        %s346 = sand.u32 %s37, 1
        %s347 = smul.addr %s346, 16
        %s348 = scalar_lea.vmem [#allocation2], %s347
        // Predicated region
        $region53: #{tpu_custom_call.1} parent=51 // pred_check
          %p349 = pneg %p50
        $region54: #{tpu_custom_call.1} parent=51 // pred_check_branch
          %351 = sbr.rel (%p349) target = $region56
        $region55: #{tpu_custom_call.1} parent=51 // pred_region
          %352 = dma.done %s345, 256
        $region56: #{tpu_custom_call.1} parent=51 // pred_fallthru
          _
        %s353 = sand.u32 %s29, 1
        %s354 = scalar_lea.sflag [#allocation6], %s353
        %s355 = sand.u32 %s63, 1
        %s356 = smul.addr %s355, 16
        %s357 = scalar_lea.vmem [#allocation5], %s356
        // Predicated region
        $region57: #{tpu_custom_call.1} parent=51 // pred_check
          %p358 = pneg %p76
        $region58: #{tpu_custom_call.1} parent=51 // pred_check_branch
          %360 = sbr.rel (%p358) target = $region60
        $region59: #{tpu_custom_call.1} parent=51 // pred_region
          %361 = dma.done %s354, 256
        $region60: #{tpu_custom_call.1} parent=51 // pred_fallthru
          _
        // Predicated region
        $region61: #{tpu_custom_call.1} parent=51 // pred_check
          %p362 = pneg %p97
        $region62: #{tpu_custom_call.1} parent=51 // pred_check_branch
          %364 = sbr.rel (%p362) target = $region64
        $region63: #{tpu_custom_call.1} parent=51 // pred_region
          %365 = dma.done [#allocation6], 256
        $region64: #{tpu_custom_call.1} parent=51 // pred_fallthru
          _
        // Predicated region
        $region65: #{tpu_custom_call.1} parent=51 // pred_check
          %p366 = pneg %p139
        $region66: #{tpu_custom_call.1} parent=51 // pred_check_branch
          %368 = sbr.rel (%p366) target = $region68
        $region67: #{tpu_custom_call.1} parent=51 // pred_region
          %369 = dma.done [#allocation9], 512
        $region68: #{tpu_custom_call.1} parent=51 // pred_fallthru
          _
        // Predicated region
        $region69: #{tpu_custom_call.1} parent=51 // pred_check
          %p370 = pneg %p181
        $region70: #{tpu_custom_call.1} parent=51 // pred_check_branch
          %372 = sbr.rel (%p370) target = $region72
        $region71: #{tpu_custom_call.1} parent=51 // pred_region
          %373 = dma.done [#allocation9], 512
        $region72: #{tpu_custom_call.1} parent=51 // pred_fallthru
          _
        %s374 = sand.u32 %s37, 1
        %s375 = scalar_lea.sflag [#allocation3], %s374
        %s376 = sand.u32 %s37, 1
        %s377 = smul.addr %s376, 16
        %s378 = scalar_lea.vmem [#allocation2], %s377
        %p379 = pneg %p50
        %p380 = pneg %p47
        %s381 = sand.u32 %s29, 1
        %s382 = scalar_lea.sflag [#allocation6], %s381
        %s383 = sand.u32 %s63, 1
        %s384 = smul.addr %s383, 16
        %s385 = scalar_lea.vmem [#allocation5], %s384
        %p386 = pneg %p76
        %p387 = pneg %p73
        %p388 = pneg %p97
        %p389 = pneg %p94
        %p390 = pneg %p118
        %p391 = pneg %p115
        %p392 = pneg %p139
        %p393 = pneg %p136
        %p394 = pneg %p160
        %p395 = pneg %p157
        %p396 = pneg %p181
        %p397 = pneg %p178
        %p398 = pneg %p202
        %p399 = pneg %p199
        %p400 = pneg %p228
        %p401 = pneg %p225
        %s402 = sand.u32 %s215, 1
        %s403 = scalar_lea.sflag [#allocation4], %s402
        %s404 = sand.u32 %s215, 1
        %s405 = smul.addr %s404, 16
        %s406 = scalar_lea.vmem [#allocation11], %s405
        %s407 = smul.u32 2, %s29
        %s408 = smul.u32 2, %s29
        %s409 = smul.u32 2, %s29
        %v410 = vld [vmem:[%s348] sm:$0xff]
        %v411 = vld [vmem:[%s348 + $0x8] sm:$0xff]
        %v412 = vld [vmem:[%s357] sm:$0xff]
        %v413 = vld [vmem:[%s357 + $0x8] sm:$0xff]
        %v414 = vld [vmem:[#allocation7] sm:$0xff]
        %v415 = vld [vmem:[#allocation7 + $0x8] sm:$0xff]
        %v416 = vld [vmem:[%s3] sm:$0x1]
        %v418 = vlaneseq
        %v419 = vshrl.u32 %v418, 7
        %v420 = vsub.s32 0, %v419
        %v421 = vrot.slane %v416, %v420
        %vm423 = vcmask 130048
        %v425 = vsel %vm423, %v410, 0
        %v428 = vsel %vm423, %v411, 0
        %430 = vmatprep.subr.mxu0 0.0
        %431 = vmatpush1.msra.mxu0 0.0
        %432 = vmatprep.subr.mxu0 0.0
        %433 = vmatpush1.msra.mxu0 0.0
        %434 = vmatprep.subr.mxu0 0.0
        %435 = vmatpush1.msra.mxu0 0.0
        %436 = vmatprep.subr.mxu0 0.0
        %437 = vmatpush1.msra.mxu0 0.0
        %438 = vmatprep.subr.mxu0 0.0
        %439 = vmatpush1.msra.mxu0 0.0
        %440 = vmatprep.subr.mxu0 0.0
        %441 = vmatpush1.msra.mxu0 0.0
        %442 = vmatprep.subr.mxu0 0.0
        %443 = vmatpush1.msra.mxu0 0.0
        %444 = vmatprep.subr.mxu0 0.0
        %445 = vmatpush1.msra.mxu0 0.0
        %446 = vmatprep.subr.mxu0 0.0
        %447 = vmatpush1.msra.mxu0 0.0
        %448 = vmatprep.subr.mxu0 0.0
        %449 = vmatpush1.msra.mxu0 0.0
        %450 = vmatprep.subr.mxu0 0.0
        %451 = vmatpush1.msra.mxu0 0.0
        %452 = vmatprep.subr.mxu0 0.0
        %453 = vmatpush1.msra.mxu0 0.0
        %454 = vmatprep.subr.mxu0 0.0
        %455 = vmatpush1.msra.mxu0 0.0
        %456 = vmatprep.subr.mxu0 0.0
        %457 = vmatpush1.msra.mxu0 0.0
        %458 = vmatprep.subr.mxu0 0.0
        %459 = vmatpush1.msra.mxu0 %v415
        %460 = vmatprep.subr.mxu0 0.0
        %461 = vmatpush1.msra.mxu0 %v414
        %462 = vmatprep.subr.mxu0 0.0
        %463 = vmatpush2.msra.mxu0 0.0
        %464 = vmatprep.subr.mxu0 0.0
        %465 = vmatpush2.msra.mxu0 0.0
        %466 = vmatprep.subr.mxu0 0.0
        %467 = vmatpush2.msra.mxu0 0.0
        %468 = vmatprep.subr.mxu0 0.0
        %469 = vmatpush2.msra.mxu0 0.0
        %470 = vmatprep.subr.mxu0 0.0
        %471 = vmatpush2.msra.mxu0 0.0
        %472 = vmatprep.subr.mxu0 0.0
        %473 = vmatpush2.msra.mxu0 0.0
        %474 = vmatprep.subr.mxu0 0.0
        %475 = vmatpush2.msra.mxu0 0.0
        %476 = vmatprep.subr.mxu0 0.0
        %477 = vmatpush2.msra.mxu0 0.0
        %478 = vmatprep.subr.mxu0 0.0
        %479 = vmatpush2.msra.mxu0 0.0
        %480 = vmatprep.subr.mxu0 0.0
        %481 = vmatpush2.msra.mxu0 0.0
        %482 = vmatprep.subr.mxu0 0.0
        %483 = vmatpush2.msra.mxu0 0.0
        %484 = vmatprep.subr.mxu0 0.0
        %485 = vmatpush2.msra.mxu0 0.0
        %486 = vmatprep.subr.mxu0 0.0
        %487 = vmatpush2.msra.mxu0 0.0
        %488 = vmatprep.subr.mxu0 0.0
        %489 = vmatpush2.msra.mxu0 0.0
        %490 = vmatprep.subr.mxu0 0.0
        %491 = vmatpush2.msra.mxu0 0.0
        %492 = vmatprep.subr.mxu0 0.0
        %493 = vmatpush2.msra.mxu0 0.0
        %494 = vmatprep.mubr.f32.mxu0 0.0
        %495 = vmatmul.mubr.f32.gmra.mxu0 %v425
        %v496 = vpop.f32.mrf.mxu0
        %v497 = vadd.f32 %v421, %v496
        %v498 = vpop.f32.mrf.mxu0
        %499 = vmatprep.mubr.f32.mxu0 0.0
        %500 = vmatmul.mubr.f32.gmra.mxu0 %v428
        %v501 = vpop.f32.mrf.mxu0
        %v502 = vadd.f32 %v421, %v501
        %v503 = vpop.f32.mrf.mxu0
        %504 = vdwg.mxu0
        %v505 = vmax.f32 %v497, 0.0
        %v506 = vmax.f32 %v502, 0.0
        %v507 = vld [vmem:[#allocation8] sm:$0xff]
        %v508 = vld [vmem:[#allocation8 + $0x8] sm:$0xff]
        %v509 = vld [vmem:[#allocation8 + $0x10] sm:$0xff]
        %v510 = vld [vmem:[#allocation8 + $0x18] sm:$0xff]
        %v511 = vld [vmem:[%s5] sm:$0x1]
        %v513 = vlaneseq
        %v514 = vshrl.u32 %v513, 7
        %v515 = vsub.s32 0, %v514
        %v516 = vrot.slane %v511, %v515
        %vm518 = vcmask 261120
        %v520 = vsel %vm518, %v505, 0
        %v523 = vsel %vm518, %v506, 0
        %525 = vmatprep.subr.mxu0 0.0
        %526 = vmatpush1.msra.mxu0 0.0
        %527 = vmatprep.subr.mxu0 0.0
        %528 = vmatpush1.msra.mxu0 0.0
        %529 = vmatprep.subr.mxu0 0.0
        %530 = vmatpush1.msra.mxu0 0.0
        %531 = vmatprep.subr.mxu0 0.0
        %532 = vmatpush1.msra.mxu0 0.0
        %533 = vmatprep.subr.mxu0 0.0
        %534 = vmatpush1.msra.mxu0 0.0
        %535 = vmatprep.subr.mxu0 0.0
        %536 = vmatpush1.msra.mxu0 0.0
        %537 = vmatprep.subr.mxu0 0.0
        %538 = vmatpush1.msra.mxu0 0.0
        %539 = vmatprep.subr.mxu0 0.0
        %540 = vmatpush1.msra.mxu0 0.0
        %541 = vmatprep.subr.mxu0 0.0
        %542 = vmatpush1.msra.mxu0 0.0
        %543 = vmatprep.subr.mxu0 0.0
        %544 = vmatpush1.msra.mxu0 0.0
        %545 = vmatprep.subr.mxu0 0.0
        %546 = vmatpush1.msra.mxu0 0.0
        %547 = vmatprep.subr.mxu0 0.0
        %548 = vmatpush1.msra.mxu0 0.0
        %549 = vmatprep.subr.mxu0 0.0
        %550 = vmatpush1.msra.mxu0 %v510
        %551 = vmatprep.subr.mxu0 0.0
        %552 = vmatpush1.msra.mxu0 %v509
        %553 = vmatprep.subr.mxu0 0.0
        %554 = vmatpush1.msra.mxu0 %v508
        %555 = vmatprep.subr.mxu0 0.0
        %556 = vmatpush1.msra.mxu0 %v507
        %557 = vmatprep.subr.mxu0 0.0
        %558 = vmatpush2.msra.mxu0 0.0
        %559 = vmatprep.subr.mxu0 0.0
        %560 = vmatpush2.msra.mxu0 0.0
        %561 = vmatprep.subr.mxu0 0.0
        %562 = vmatpush2.msra.mxu0 0.0
        %563 = vmatprep.subr.mxu0 0.0
        %564 = vmatpush2.msra.mxu0 0.0
        %565 = vmatprep.subr.mxu0 0.0
        %566 = vmatpush2.msra.mxu0 0.0
        %567 = vmatprep.subr.mxu0 0.0
        %568 = vmatpush2.msra.mxu0 0.0
        %569 = vmatprep.subr.mxu0 0.0
        %570 = vmatpush2.msra.mxu0 0.0
        %571 = vmatprep.subr.mxu0 0.0
        %572 = vmatpush2.msra.mxu0 0.0
        %573 = vmatprep.subr.mxu0 0.0
        %574 = vmatpush2.msra.mxu0 0.0
        %575 = vmatprep.subr.mxu0 0.0
        %576 = vmatpush2.msra.mxu0 0.0
        %577 = vmatprep.subr.mxu0 0.0
        %578 = vmatpush2.msra.mxu0 0.0
        %579 = vmatprep.subr.mxu0 0.0
        %580 = vmatpush2.msra.mxu0 0.0
        %581 = vmatprep.subr.mxu0 0.0
        %582 = vmatpush2.msra.mxu0 0.0
        %583 = vmatprep.subr.mxu0 0.0
        %584 = vmatpush2.msra.mxu0 0.0
        %585 = vmatprep.subr.mxu0 0.0
        %586 = vmatpush2.msra.mxu0 0.0
        %587 = vmatprep.subr.mxu0 0.0
        %588 = vmatpush2.msra.mxu0 0.0
        %589 = vmatprep.mubr.f32.mxu0 0.0
        %590 = vmatmul.mubr.f32.gmra.mxu0 %v520
        %v591 = vpop.f32.mrf.mxu0
        %v592 = vadd.f32 %v516, %v591
        %v593 = vpop.f32.mrf.mxu0
        %594 = vmatprep.mubr.f32.mxu0 0.0
        %595 = vmatmul.mubr.f32.gmra.mxu0 %v523
        %v596 = vpop.f32.mrf.mxu0
        %v597 = vadd.f32 %v516, %v596
        %v598 = vpop.f32.mrf.mxu0
        %599 = vdwg.mxu0
        %v600 = vmax.f32 %v592, 0.0
        %v601 = vmax.f32 %v597, 0.0
        %v602 = vld [vmem:[#allocation10] sm:$0xff]
        %v603 = vld [vmem:[#allocation10 + $0x8] sm:$0xff]
        %v604 = vld [vmem:[#allocation10 + $0x10] sm:$0xff]
        %v605 = vld [vmem:[#allocation10 + $0x18] sm:$0xff]
        %v606 = vld [vmem:[%s7] sm:$0x1]
        %v608 = vlaneseq
        %v609 = vshrl.u32 %v608, 7
        %v610 = vsub.s32 0, %v609
        %v611 = vrot.slane %v606, %v610
        %v614 = vsel %vm518, %v600, 0
        %v617 = vsel %vm518, %v601, 0
        %619 = vmatprep.subr.mxu0 0.0
        %620 = vmatpush1.msra.mxu0 0.0
        %621 = vmatprep.subr.mxu0 0.0
        %622 = vmatpush1.msra.mxu0 0.0
        %623 = vmatprep.subr.mxu0 0.0
        %624 = vmatpush1.msra.mxu0 0.0
        %625 = vmatprep.subr.mxu0 0.0
        %626 = vmatpush1.msra.mxu0 0.0
        %627 = vmatprep.subr.mxu0 0.0
        %628 = vmatpush1.msra.mxu0 0.0
        %629 = vmatprep.subr.mxu0 0.0
        %630 = vmatpush1.msra.mxu0 0.0
        %631 = vmatprep.subr.mxu0 0.0
        %632 = vmatpush1.msra.mxu0 0.0
        %633 = vmatprep.subr.mxu0 0.0
        %634 = vmatpush1.msra.mxu0 0.0
        %635 = vmatprep.subr.mxu0 0.0
        %636 = vmatpush1.msra.mxu0 0.0
        %637 = vmatprep.subr.mxu0 0.0
        %638 = vmatpush1.msra.mxu0 0.0
        %639 = vmatprep.subr.mxu0 0.0
        %640 = vmatpush1.msra.mxu0 0.0
        %641 = vmatprep.subr.mxu0 0.0
        %642 = vmatpush1.msra.mxu0 0.0
        %643 = vmatprep.subr.mxu0 0.0
        %644 = vmatpush1.msra.mxu0 %v605
        %645 = vmatprep.subr.mxu0 0.0
        %646 = vmatpush1.msra.mxu0 %v604
        %647 = vmatprep.subr.mxu0 0.0
        %648 = vmatpush1.msra.mxu0 %v603
        %649 = vmatprep.subr.mxu0 0.0
        %650 = vmatpush1.msra.mxu0 %v602
        %651 = vmatprep.subr.mxu0 0.0
        %652 = vmatpush2.msra.mxu0 0.0
        %653 = vmatprep.subr.mxu0 0.0
        %654 = vmatpush2.msra.mxu0 0.0
        %655 = vmatprep.subr.mxu0 0.0
        %656 = vmatpush2.msra.mxu0 0.0
        %657 = vmatprep.subr.mxu0 0.0
        %658 = vmatpush2.msra.mxu0 0.0
        %659 = vmatprep.subr.mxu0 0.0
        %660 = vmatpush2.msra.mxu0 0.0
        %661 = vmatprep.subr.mxu0 0.0
        %662 = vmatpush2.msra.mxu0 0.0
        %663 = vmatprep.subr.mxu0 0.0
        %664 = vmatpush2.msra.mxu0 0.0
        %665 = vmatprep.subr.mxu0 0.0
        %666 = vmatpush2.msra.mxu0 0.0
        %667 = vmatprep.subr.mxu0 0.0
        %668 = vmatpush2.msra.mxu0 0.0
        %669 = vmatprep.subr.mxu0 0.0
        %670 = vmatpush2.msra.mxu0 0.0
        %671 = vmatprep.subr.mxu0 0.0
        %672 = vmatpush2.msra.mxu0 0.0
        %673 = vmatprep.subr.mxu0 0.0
        %674 = vmatpush2.msra.mxu0 0.0
        %675 = vmatprep.subr.mxu0 0.0
        %676 = vmatpush2.msra.mxu0 0.0
        %677 = vmatprep.subr.mxu0 0.0
        %678 = vmatpush2.msra.mxu0 0.0
        %679 = vmatprep.subr.mxu0 0.0
        %680 = vmatpush2.msra.mxu0 0.0
        %681 = vmatprep.subr.mxu0 0.0
        %682 = vmatpush2.msra.mxu0 0.0
        %683 = vmatprep.mubr.f32.mxu0 0.0
        %684 = vmatmul.mubr.f32.gmra.mxu0 %v614
        %v685 = vpop.f32.mrf.mxu0
        %v686 = vadd.f32 %v611, %v685
        %v687 = vpop.f32.mrf.mxu0
        %688 = vmatprep.mubr.f32.mxu0 0.0
        %689 = vmatmul.mubr.f32.gmra.mxu0 %v617
        %v690 = vpop.f32.mrf.mxu0
        %v691 = vadd.f32 %v611, %v690
        %v692 = vpop.f32.mrf.mxu0
        %693 = vdwg.mxu0
        %vm694 = vcmask 64512
        %v696 = vsel %vm694, %v412, 0
        %v698 = vsel %vm694, %v410, 0
        %700 = vmatprep.subr.mxu0 0.0
        %701 = vmatpush1.xpose.msra.mxu0 0.0
        %702 = vmatprep.subr.mxu0 0.0
        %703 = vmatpush1.xpose.msra.mxu0 0.0
        %704 = vmatprep.subr.mxu0 0.0
        %705 = vmatpush1.xpose.msra.mxu0 0.0
        %706 = vmatprep.subr.mxu0 0.0
        %707 = vmatpush1.xpose.msra.mxu0 0.0
        %708 = vmatprep.subr.mxu0 0.0
        %709 = vmatpush1.xpose.msra.mxu0 0.0
        %710 = vmatprep.subr.mxu0 0.0
        %711 = vmatpush1.xpose.msra.mxu0 0.0
        %712 = vmatprep.subr.mxu0 0.0
        %713 = vmatpush1.xpose.msra.mxu0 0.0
        %714 = vmatprep.subr.mxu0 0.0
        %715 = vmatpush1.xpose.msra.mxu0 0.0
        %716 = vmatprep.subr.mxu0 0.0
        %717 = vmatpush1.xpose.msra.mxu0 0.0
        %718 = vmatprep.subr.mxu0 0.0
        %719 = vmatpush1.xpose.msra.mxu0 0.0
        %720 = vmatprep.subr.mxu0 0.0
        %721 = vmatpush1.xpose.msra.mxu0 0.0
        %722 = vmatprep.subr.mxu0 0.0
        %723 = vmatpush1.xpose.msra.mxu0 0.0
        %724 = vmatprep.subr.mxu0 0.0
        %725 = vmatpush1.xpose.msra.mxu0 0.0
        %726 = vmatprep.subr.mxu0 0.0
        %727 = vmatpush1.xpose.msra.mxu0 0.0
        %728 = vmatprep.subr.mxu0 0.0
        %729 = vmatpush1.xpose.msra.mxu0 0.0
        %730 = vmatprep.subr.mxu0 0.0
        %731 = vmatpush1.xpose.msra.mxu0 %v698
        %732 = vmatprep.subr.mxu0 0.0
        %733 = vmatpush2.xpose.msra.mxu0 0.0
        %734 = vmatprep.subr.mxu0 0.0
        %735 = vmatpush2.xpose.msra.mxu0 0.0
        %736 = vmatprep.subr.mxu0 0.0
        %737 = vmatpush2.xpose.msra.mxu0 0.0
        %738 = vmatprep.subr.mxu0 0.0
        %739 = vmatpush2.xpose.msra.mxu0 0.0
        %740 = vmatprep.subr.mxu0 0.0
        %741 = vmatpush2.xpose.msra.mxu0 0.0
        %742 = vmatprep.subr.mxu0 0.0
        %743 = vmatpush2.xpose.msra.mxu0 0.0
        %744 = vmatprep.subr.mxu0 0.0
        %745 = vmatpush2.xpose.msra.mxu0 0.0
        %746 = vmatprep.subr.mxu0 0.0
        %747 = vmatpush2.xpose.msra.mxu0 0.0
        %748 = vmatprep.subr.mxu0 0.0
        %749 = vmatpush2.xpose.msra.mxu0 0.0
        %750 = vmatprep.subr.mxu0 0.0
        %751 = vmatpush2.xpose.msra.mxu0 0.0
        %752 = vmatprep.subr.mxu0 0.0
        %753 = vmatpush2.xpose.msra.mxu0 0.0
        %754 = vmatprep.subr.mxu0 0.0
        %755 = vmatpush2.xpose.msra.mxu0 0.0
        %756 = vmatprep.subr.mxu0 0.0
        %757 = vmatpush2.xpose.msra.mxu0 0.0
        %758 = vmatprep.subr.mxu0 0.0
        %759 = vmatpush2.xpose.msra.mxu0 0.0
        %760 = vmatprep.subr.mxu0 0.0
        %761 = vmatpush2.xpose.msra.mxu0 0.0
        %762 = vmatprep.subr.mxu0 0.0
        %763 = vmatpush2.xpose.msra.mxu0 0.0
        %764 = vmatprep.mubr.f32.mxu0 0.0
        %765 = vmatmul.mubr.f32.gmra.mxu0 %v696
        %v766 = vpop.f32.mrf.mxu0
        %v767 = vadd.f32 0.0, %v766
        %v768 = vpop.f32.mrf.mxu0
        %769 = vdwg.mxu0
        %v771 = vsel %vm694, %v413, 0
        %v773 = vsel %vm694, %v411, 0
        %775 = vmatprep.subr.mxu0 0.0
        %776 = vmatpush1.xpose.msra.mxu0 0.0
        %777 = vmatprep.subr.mxu0 0.0
        %778 = vmatpush1.xpose.msra.mxu0 0.0
        %779 = vmatprep.subr.mxu0 0.0
        %780 = vmatpush1.xpose.msra.mxu0 0.0
        %781 = vmatprep.subr.mxu0 0.0
        %782 = vmatpush1.xpose.msra.mxu0 0.0
        %783 = vmatprep.subr.mxu0 0.0
        %784 = vmatpush1.xpose.msra.mxu0 0.0
        %785 = vmatprep.subr.mxu0 0.0
        %786 = vmatpush1.xpose.msra.mxu0 0.0
        %787 = vmatprep.subr.mxu0 0.0
        %788 = vmatpush1.xpose.msra.mxu0 0.0
        %789 = vmatprep.subr.mxu0 0.0
        %790 = vmatpush1.xpose.msra.mxu0 0.0
        %791 = vmatprep.subr.mxu0 0.0
        %792 = vmatpush1.xpose.msra.mxu0 0.0
        %793 = vmatprep.subr.mxu0 0.0
        %794 = vmatpush1.xpose.msra.mxu0 0.0
        %795 = vmatprep.subr.mxu0 0.0
        %796 = vmatpush1.xpose.msra.mxu0 0.0
        %797 = vmatprep.subr.mxu0 0.0
        %798 = vmatpush1.xpose.msra.mxu0 0.0
        %799 = vmatprep.subr.mxu0 0.0
        %800 = vmatpush1.xpose.msra.mxu0 0.0
        %801 = vmatprep.subr.mxu0 0.0
        %802 = vmatpush1.xpose.msra.mxu0 0.0
        %803 = vmatprep.subr.mxu0 0.0
        %804 = vmatpush1.xpose.msra.mxu0 0.0
        %805 = vmatprep.subr.mxu0 0.0
        %806 = vmatpush1.xpose.msra.mxu0 %v773
        %807 = vmatprep.subr.mxu0 0.0
        %808 = vmatpush2.xpose.msra.mxu0 0.0
        %809 = vmatprep.subr.mxu0 0.0
        %810 = vmatpush2.xpose.msra.mxu0 0.0
        %811 = vmatprep.subr.mxu0 0.0
        %812 = vmatpush2.xpose.msra.mxu0 0.0
        %813 = vmatprep.subr.mxu0 0.0
        %814 = vmatpush2.xpose.msra.mxu0 0.0
        %815 = vmatprep.subr.mxu0 0.0
        %816 = vmatpush2.xpose.msra.mxu0 0.0
        %817 = vmatprep.subr.mxu0 0.0
        %818 = vmatpush2.xpose.msra.mxu0 0.0
        %819 = vmatprep.subr.mxu0 0.0
        %820 = vmatpush2.xpose.msra.mxu0 0.0
        %821 = vmatprep.subr.mxu0 0.0
        %822 = vmatpush2.xpose.msra.mxu0 0.0
        %823 = vmatprep.subr.mxu0 0.0
        %824 = vmatpush2.xpose.msra.mxu0 0.0
        %825 = vmatprep.subr.mxu0 0.0
        %826 = vmatpush2.xpose.msra.mxu0 0.0
        %827 = vmatprep.subr.mxu0 0.0
        %828 = vmatpush2.xpose.msra.mxu0 0.0
        %829 = vmatprep.subr.mxu0 0.0
        %830 = vmatpush2.xpose.msra.mxu0 0.0
        %831 = vmatprep.subr.mxu0 0.0
        %832 = vmatpush2.xpose.msra.mxu0 0.0
        %833 = vmatprep.subr.mxu0 0.0
        %834 = vmatpush2.xpose.msra.mxu0 0.0
        %835 = vmatprep.subr.mxu0 0.0
        %836 = vmatpush2.xpose.msra.mxu0 0.0
        %837 = vmatprep.subr.mxu0 0.0
        %838 = vmatpush2.xpose.msra.mxu0 0.0
        %839 = vmatprep.mubr.f32.mxu0 0.0
        %840 = vmatmul.mubr.f32.gmra.mxu0 %v771
        %v841 = vpop.f32.mrf.mxu0
        %v842 = vadd.f32 0.0, %v841
        %v843 = vpop.f32.mrf.mxu0
        %844 = vdwg.mxu0
        %v845 = vmul.f32 %v767, 0.35355338
        %v846 = vmul.f32 %v842, 0.35355338
        %v847 = vsel %vm694, %v845, -inf
        %848 = vmax.xlane.f32.xlu0 %v847
        %v849 = vpop.xlane.xlu0 %848
        %v850 = vsel %vm694, %v846, -inf
        %851 = vmax.xlane.f32.xlu0 %v850
        %v852 = vpop.xlane.xlu0 %851
        %v853 = vsub.f32 %v845, %v849
        %v854 = vsub.f32 %v846, %v852
        %v855 = vmul.f32 %v853, 1.442695
        %v856 = vpow.pop %v855
        %v857 = vmul.f32 %v854, 1.442695
        %v858 = vpow.pop %v857
        %v859 = vsel %vm694, %v856, 0.0
        %860 = vadd.xlane.f32.xlu0 %v859
        %v861 = vpop.xlane.xlu0 %860
        %v862 = vsel %vm694, %v858, 0.0
        %863 = vadd.xlane.f32.xlu0 %v862
        %v864 = vpop.xlane.xlu0 %863
        %v865 = vrcp.pop %v861
        %v866 = vmul.f32 %v856, %v865
        %v867 = vrcp.pop %v864
        %v868 = vmul.f32 %v858, %v867
        %v870 = vsel %vm694, %v866, 0
        %872 = vmatprep.subr.mxu0 0.0
        %873 = vmatpush1.msra.mxu0 0.0
        %874 = vmatprep.subr.mxu0 0.0
        %875 = vmatpush1.msra.mxu0 0.0
        %876 = vmatprep.subr.mxu0 0.0
        %877 = vmatpush1.msra.mxu0 0.0
        %878 = vmatprep.subr.mxu0 0.0
        %879 = vmatpush1.msra.mxu0 0.0
        %880 = vmatprep.subr.mxu0 0.0
        %881 = vmatpush1.msra.mxu0 0.0
        %882 = vmatprep.subr.mxu0 0.0
        %883 = vmatpush1.msra.mxu0 0.0
        %884 = vmatprep.subr.mxu0 0.0
        %885 = vmatpush1.msra.mxu0 0.0
        %886 = vmatprep.subr.mxu0 0.0
        %887 = vmatpush1.msra.mxu0 0.0
        %888 = vmatprep.subr.mxu0 0.0
        %889 = vmatpush1.msra.mxu0 0.0
        %890 = vmatprep.subr.mxu0 0.0
        %891 = vmatpush1.msra.mxu0 0.0
        %892 = vmatprep.subr.mxu0 0.0
        %893 = vmatpush1.msra.mxu0 0.0
        %894 = vmatprep.subr.mxu0 0.0
        %895 = vmatpush1.msra.mxu0 0.0
        %896 = vmatprep.subr.mxu0 0.0
        %897 = vmatpush1.msra.mxu0 0.0
        %898 = vmatprep.subr.mxu0 0.0
        %899 = vmatpush1.msra.mxu0 0.0
        %900 = vmatprep.subr.mxu0 0.0
        %901 = vmatpush1.msra.mxu0 0.0
        %902 = vmatprep.subr.mxu0 0.0
        %903 = vmatpush1.msra.mxu0 %v686
        %904 = vmatprep.subr.mxu0 0.0
        %905 = vmatpush2.msra.mxu0 0.0
        %906 = vmatprep.subr.mxu0 0.0
        %907 = vmatpush2.msra.mxu0 0.0
        %908 = vmatprep.subr.mxu0 0.0
        %909 = vmatpush2.msra.mxu0 0.0
        %910 = vmatprep.subr.mxu0 0.0
        %911 = vmatpush2.msra.mxu0 0.0
        %912 = vmatprep.subr.mxu0 0.0
        %913 = vmatpush2.msra.mxu0 0.0
        %914 = vmatprep.subr.mxu0 0.0
        %915 = vmatpush2.msra.mxu0 0.0
        %916 = vmatprep.subr.mxu0 0.0
        %917 = vmatpush2.msra.mxu0 0.0
        %918 = vmatprep.subr.mxu0 0.0
        %919 = vmatpush2.msra.mxu0 0.0
        %920 = vmatprep.subr.mxu0 0.0
        %921 = vmatpush2.msra.mxu0 0.0
        %922 = vmatprep.subr.mxu0 0.0
        %923 = vmatpush2.msra.mxu0 0.0
        %924 = vmatprep.subr.mxu0 0.0
        %925 = vmatpush2.msra.mxu0 0.0
        %926 = vmatprep.subr.mxu0 0.0
        %927 = vmatpush2.msra.mxu0 0.0
        %928 = vmatprep.subr.mxu0 0.0
        %929 = vmatpush2.msra.mxu0 0.0
        %930 = vmatprep.subr.mxu0 0.0
        %931 = vmatpush2.msra.mxu0 0.0
        %932 = vmatprep.subr.mxu0 0.0
        %933 = vmatpush2.msra.mxu0 0.0
        %934 = vmatprep.subr.mxu0 0.0
        %935 = vmatpush2.msra.mxu0 0.0
        %936 = vmatprep.mubr.f32.mxu0 0.0
        %937 = vmatmul.mubr.f32.gmra.mxu0 %v870
        %v938 = vpop.f32.mrf.mxu0
        %v939 = vadd.f32 0.0, %v938
        %v940 = vpop.f32.mrf.mxu0
        %941 = vdwg.mxu0
        %v943 = vsel %vm694, %v868, 0
        %945 = vmatprep.subr.mxu0 0.0
        %946 = vmatpush1.msra.mxu0 0.0
        %947 = vmatprep.subr.mxu0 0.0
        %948 = vmatpush1.msra.mxu0 0.0
        %949 = vmatprep.subr.mxu0 0.0
        %950 = vmatpush1.msra.mxu0 0.0
        %951 = vmatprep.subr.mxu0 0.0
        %952 = vmatpush1.msra.mxu0 0.0
        %953 = vmatprep.subr.mxu0 0.0
        %954 = vmatpush1.msra.mxu0 0.0
        %955 = vmatprep.subr.mxu0 0.0
        %956 = vmatpush1.msra.mxu0 0.0
        %957 = vmatprep.subr.mxu0 0.0
        %958 = vmatpush1.msra.mxu0 0.0
        %959 = vmatprep.subr.mxu0 0.0
        %960 = vmatpush1.msra.mxu0 0.0
        %961 = vmatprep.subr.mxu0 0.0
        %962 = vmatpush1.msra.mxu0 0.0
        %963 = vmatprep.subr.mxu0 0.0
        %964 = vmatpush1.msra.mxu0 0.0
        %965 = vmatprep.subr.mxu0 0.0
        %966 = vmatpush1.msra.mxu0 0.0
        %967 = vmatprep.subr.mxu0 0.0
        %968 = vmatpush1.msra.mxu0 0.0
        %969 = vmatprep.subr.mxu0 0.0
        %970 = vmatpush1.msra.mxu0 0.0
        %971 = vmatprep.subr.mxu0 0.0
        %972 = vmatpush1.msra.mxu0 0.0
        %973 = vmatprep.subr.mxu0 0.0
        %974 = vmatpush1.msra.mxu0 0.0
        %975 = vmatprep.subr.mxu0 0.0
        %976 = vmatpush1.msra.mxu0 %v691
        %977 = vmatprep.subr.mxu0 0.0
        %978 = vmatpush2.msra.mxu0 0.0
        %979 = vmatprep.subr.mxu0 0.0
        %980 = vmatpush2.msra.mxu0 0.0
        %981 = vmatprep.subr.mxu0 0.0
        %982 = vmatpush2.msra.mxu0 0.0
        %983 = vmatprep.subr.mxu0 0.0
        %984 = vmatpush2.msra.mxu0 0.0
        %985 = vmatprep.subr.mxu0 0.0
        %986 = vmatpush2.msra.mxu0 0.0
        %987 = vmatprep.subr.mxu0 0.0
        %988 = vmatpush2.msra.mxu0 0.0
        %989 = vmatprep.subr.mxu0 0.0
        %990 = vmatpush2.msra.mxu0 0.0
        %991 = vmatprep.subr.mxu0 0.0
        %992 = vmatpush2.msra.mxu0 0.0
        %993 = vmatprep.subr.mxu0 0.0
        %994 = vmatpush2.msra.mxu0 0.0
        %995 = vmatprep.subr.mxu0 0.0
        %996 = vmatpush2.msra.mxu0 0.0
        %997 = vmatprep.subr.mxu0 0.0
        %998 = vmatpush2.msra.mxu0 0.0
        %999 = vmatprep.subr.mxu0 0.0
        %1000 = vmatpush2.msra.mxu0 0.0
        %1001 = vmatprep.subr.mxu0 0.0
        %1002 = vmatpush2.msra.mxu0 0.0
        %1003 = vmatprep.subr.mxu0 0.0
        %1004 = vmatpush2.msra.mxu0 0.0
        %1005 = vmatprep.subr.mxu0 0.0
        %1006 = vmatpush2.msra.mxu0 0.0
        %1007 = vmatprep.subr.mxu0 0.0
        %1008 = vmatpush2.msra.mxu0 0.0
        %1009 = vmatprep.mubr.f32.mxu0 0.0
        %1010 = vmatmul.mubr.f32.gmra.mxu0 %v943
        %v1011 = vpop.f32.mrf.mxu0
        %v1012 = vadd.f32 0.0, %v1011
        %v1013 = vpop.f32.mrf.mxu0
        %1014 = vdwg.mxu0
        %1015 = vst.msk [vmem:[%s406] sm:$0xff] %vm518, %v939
        %1016 = vst.msk [vmem:[%s406 + $0x8] sm:$0xff] %vm518, %v1012
        %s1017 = sand.u32 %s215, 1
        %s1018 = scalar_lea.sflag [#allocation4], %s1017
        %s1019 = sand.u32 %s215, 1
        %s1020 = smul.addr %s1019, 16
        %s1021 = scalar_lea.vmem [#allocation11], %s1020
        // Predicated region
        $region73: #{tpu_custom_call.1} parent=51 // pred_check
          %p1022 = pneg %p225
        $region74: #{tpu_custom_call.1} parent=51 // pred_check_branch
          %1024 = sbr.rel (%p1022) target = $region76
        $region75: #{tpu_custom_call.1} parent=51 // pred_region
          %s1025 = smul.u32 2, %s29
          %s1027 = ssub.s32 256, 256
          %1028 = vsyncadd %s1018, %s1027
          %s1029 = smul.addr %s1025, 128
          %s1030 = scalar_lea.hbm %s8, %s1029
          %s1031 = sshll.u32 %s1021, 4
          %s1032 = int_to_ptr.vmem [resolvable:$true] %s1031
          %1037 = dma.vmem_to_hbm [thread:$0]  %s1032, 256, %s1030, %s1018, 128, 128, 8
        $region76: #{tpu_custom_call.1} parent=51 // pred_fallthru
          _
      $region52: #{tpu_custom_call.1} parent=5 // pred_fallthru
        _
      %p1038 = scmp.le.s32.totalorder 2, %s24
      // Predicated region
      $region77: #{tpu_custom_call.1} parent=5 // pred_check
        %p1039 = pneg %p1038
      $region78: #{tpu_custom_call.1} parent=5 // pred_check_branch
        %1041 = sbr.rel (%p1039) target = $region80
      $region79: #{tpu_custom_call.1} parent=5 // pred_region
        %s1042 = ssub.s32 %s24, 2
        // Predicated region
        $region81: #{tpu_custom_call.1} parent=79 // pred_check
          %p1043 = pneg %p231
        $region82: #{tpu_custom_call.1} parent=79 // pred_check_branch
          %1045 = sbr.rel (%p1043) target = $region84
        $region83: #{tpu_custom_call.1} parent=79 // pred_region
          %s1046 = sand.u32 %s216, 1
          %s1047 = scalar_lea.sflag [#allocation4], %s1046
          %s1048 = sand.u32 %s216, 1
          %s1049 = smul.addr %s1048, 16
          %s1050 = scalar_lea.vmem [#allocation11], %s1049
          %1051 = dma.done %s1047, 256
        $region84: #{tpu_custom_call.1} parent=79 // pred_fallthru
          _
      $region80: #{tpu_custom_call.1} parent=5 // pred_fallthru
        _
    $region6: #{tpu_custom_call.1} parent=1 // loop_footer
      %s28 = sadd.s32 1, %s24
    $region7: #{tpu_custom_call.1} parent=1 // loop_footer_branch
      %23 = sbr.rel target = $region3
    $region8: #{tpu_custom_call.1} parent=1 // loop_exit
      _
    %1052 = vsyncpa [#allocation3], 1
    %s1053 = scalar_lea.sflag [#allocation3], 1
    %1054 = vsyncpa %s1053, 1
    %1055 = vsyncpa [#allocation6], 1
    %s1056 = scalar_lea.sflag [#allocation6], 1
    %1057 = vsyncpa %s1056, 1
    %1058 = vsyncpa [#allocation9], 1
    %1059 = vsyncpa [#allocation4], 1
    %s1060 = scalar_lea.sflag [#allocation4], 1
    %1061 = vsyncpa %s1060, 1

</llo_original>
